<compile_context>
chip_gen: v7x
topology: tpu7x:2x2x1
jax: 0.10.0
libtpu: 0.0.40
codegen_flags: <defaults>
</compile_context>

<pallas_src>
import jax
import jax.numpy as jnp
import numpy as np
from jax.experimental import pallas as pl
from jax.experimental.pallas import tpu as pltpu

EPS = 1e-5


def ca2_kernel(xb_ref, xf_ref, w1_ref, w2_ref, w3_ref, wf_ref, bias_ref, o_ref):
    K = w3_ref.shape[1]
    cdt = w1_ref.dtype

    bias = bias_ref[...]                       # (1, 64 + 2K), float32
    b1 = bias[:, 0:32]                         # BN1-folded bias
    b2 = bias[:, 32:48]                        # BN2-folded bias
    bf = bias[:, 48:48 + K]                    # factor-network bias
    b3 = bias[:, 48 + K:48 + 2 * K]            # last beta Linear bias

    # --- beta trunk (BatchNorm folded into w1/b1, w2/b2; dropout = id in eval) ---
    h = jnp.dot(xb_ref[...], w1_ref[...], preferred_element_type=jnp.float32) + b1
    h = jnp.maximum(h, 0.0)
    h = jnp.dot(h.astype(cdt), w2_ref[...], preferred_element_type=jnp.float32) + b2
    h = jnp.maximum(h, 0.0)                                          # (TM, 16) f32

    # --- factor network for this Nf tile ---
    fac = jnp.dot(xf_ref[...], wf_ref[...],
                  preferred_element_type=jnp.float32) + bf           # (TN, K) f32

    # --- fold the last beta Linear into the output contraction:
    #     out = (h @ w3 + b3) @ fac.T = h @ (w3 @ fac.T) + b3 @ fac.T
    w_eff = jax.lax.dot_general(w3_ref[...], fac.astype(cdt),
                                (((1,), (1,)), ((), ())),
                                preferred_element_type=jnp.float32)  # (16, TN)
    r = jax.lax.dot_general(b3, fac, (((1,), (1,)), ((), ())),
                            preferred_element_type=jnp.float32)      # (1, TN)
    out = jnp.dot(h.astype(cdt), w_eff.astype(cdt),
                  preferred_element_type=jnp.float32) + r            # (TM, TN)
    o_ref[...] = out.astype(o_ref.dtype)


def _round_up(x, m):
    return ((x + m - 1) // m) * m


def _default_tiles():
    # Size tiles against the generation's VMEM: v5e/v6e 128 MiB, v7x 64 MiB.
    try:
        info = pltpu.get_tpu_info()
        vmem = int(getattr(info, "vmem_capacity_bytes", 64 << 20))
    except Exception:
        vmem = 64 << 20
    return (512, 1024) if vmem >= (96 << 20) else (256, 512)


def _fold_params(params, compute_dtype):
    """Fold eval-mode BatchNorm into the preceding Linear layers; pack biases."""
    s1 = params["g1"] * jax.lax.rsqrt(params["v1"] + EPS)            # (1, 32)
    s2 = params["g2"] * jax.lax.rsqrt(params["v2"] + EPS)            # (1, 16)
    w1 = (params["w1"] * s1).astype(compute_dtype)                   # (Db, 32)
    w2 = (params["w2"] * s2).astype(compute_dtype)                   # (32, 16)
    w3 = params["w3"].astype(compute_dtype)                          # (16, K)
    wf = params["wf"].astype(compute_dtype)                          # (Df, K)
    b1 = (params["b1"] - params["m1"]) * s1 + params["be1"]          # (1, 32)
    b2 = (params["b2"] - params["m2"]) * s2 + params["be2"]          # (1, 16)
    bias = jnp.concatenate([b1, b2, params["bf"], params["b3"]],
                           axis=1).astype(jnp.float32)               # (1, 64+2K)
    return w1, w2, w3, wf, bias


def ca2_forward(x_beta, x_factor, params, *, tile_m=None, tile_n=None,
                compute_dtype=jnp.float32):
    Nb, Db = x_beta.shape
    Nf, Df = x_factor.shape
    K = params["w3"].shape[1]

    if tile_m is None or tile_n is None:
        dm, dn = _default_tiles()
        tile_m = tile_m or dm
        tile_n = tile_n or dn

    w1, w2, w3, wf, bias = _fold_params(params, compute_dtype)
    P = bias.shape[1]

    # Row-pad so the grid divides evenly; output tiles stay lane-dense
    # (tn multiple of 128) and sublane-aligned (tm multiple of 8).
    tm = min(tile_m, _round_up(Nb, 8))
    tn = min(tile_n, _round_up(Nf, 128))
    nb_p = _round_up(Nb, tm)
    nf_p = _round_up(Nf, tn)
    xb = jnp.pad(x_beta, ((0, nb_p - Nb), (0, 0))).astype(compute_dtype)
    xf = jnp.pad(x_factor, ((0, nf_p - Nf), (0, 0))).astype(compute_dtype)
    grid = (nb_p // tm, nf_p // tn)

    dsz = jnp.dtype(compute_dtype).itemsize
    flops = (2 * Nb * Nf * 16                       # fused final matmul
             + 2 * Nb * (Db * 32 + 32 * 16)         # beta trunk
             + 2 * Nf * Df * K                      # factor network
             + 2 * Nf * K * (16 + 1))               # w3/b3 folding
    bytes_accessed = (xb.size + xf.size) * dsz + nb_p * nf_p * 4 \
        + (w1.size + w2.size + w3.size + wf.size) * dsz + bias.size * 4

    out_padded = pl.pallas_call(
        ca2_kernel,
        out_shape=jax.ShapeDtypeStruct((nb_p, nf_p), jnp.float32),
        grid_spec=pltpu.PrefetchScalarGridSpec(
            num_scalar_prefetch=0,
            grid=grid,
            in_specs=[
                pl.BlockSpec((tm, Db), lambda i, j: (i, 0)),   # x_beta row tile
                pl.BlockSpec((tn, Df), lambda i, j: (j, 0)),   # x_factor row tile
                pl.BlockSpec((Db, 32), lambda i, j: (0, 0)),   # w1 (BN1 folded)
                pl.BlockSpec((32, 16), lambda i, j: (0, 0)),   # w2 (BN2 folded)
                pl.BlockSpec((16, K), lambda i, j: (0, 0)),    # w3
                pl.BlockSpec((Df, K), lambda i, j: (0, 0)),    # wf
                pl.BlockSpec((1, P), lambda i, j: (0, 0)),     # packed biases
            ],
            out_specs=pl.BlockSpec((tm, tn), lambda i, j: (i, j)),
        ),
        compiler_params=pltpu.CompilerParams(
            dimension_semantics=("parallel", "parallel"),
            vmem_limit_bytes=32 << 20,
        ),
        cost_estimate=pl.CostEstimate(
            flops=flops, transcendentals=0, bytes_accessed=bytes_accessed),
    )(xb, xf, w1, w2, w3, wf, bias)

    return out_padded[:Nb, :Nf]


def reference_forward(x_beta, x_factor, p):
    h = x_beta @ p["w1"] + p["b1"]
    h = (h - p["m1"]) / jnp.sqrt(p["v1"] + EPS) * p["g1"] + p["be1"]
    h = jnp.maximum(h, 0.0)
    h = h @ p["w2"] + p["b2"]
    h = (h - p["m2"]) / jnp.sqrt(p["v2"] + EPS) * p["g2"] + p["be2"]
    h = jnp.maximum(h, 0.0)
    beta = h @ p["w3"] + p["b3"]
    fac = x_factor @ p["wf"] + p["bf"]
    return beta @ fac.T


def make_params(key, Db, Df, K):
    ks = jax.random.split(key, 12)
    u = lambda k, shape, s=0.2: s * jax.random.normal(k, shape, dtype=jnp.float32)
    return {
        # Linear weights pre-transposed to (in, out); biases / BN params as (1, out)
        "w1": u(ks[0], (Db, 32)), "b1": u(ks[1], (1, 32)),
        "g1": 1.0 + u(ks[2], (1, 32), 0.05), "be1": u(ks[3], (1, 32), 0.05),
        "m1": u(ks[4], (1, 32), 0.05), "v1": 1.0 + 0.1 * jnp.abs(u(ks[4], (1, 32))),
        "w2": u(ks[5], (32, 16)), "b2": u(ks[6], (1, 16)),
        "g2": 1.0 + u(ks[7], (1, 16), 0.05), "be2": u(ks[8], (1, 16), 0.05),
        "m2": u(ks[9], (1, 16), 0.05), "v2": 1.0 + 0.1 * jnp.abs(u(ks[9], (1, 16))),
        "w3": u(ks[10], (16, K)), "b3": u(ks[10], (1, K)),
        "wf": u(ks[11], (Df, K)), "bf": u(ks[11], (1, K)),
    }


if __name__ == "__main__":
    # Small shapes: Nb samples for beta input, Nf samples for factor input,
    # Db = input_dim_beta, Df = input_dim_factor, K = output_dim_beta = output_dim_factor
    Nb, Db = 32, 16
    Nf, Df = 16, 8
    K = 8

    key = jax.random.PRNGKey(0)
    k_xb, k_xf, k_p = jax.random.split(key, 3)
    x_beta = jax.random.normal(k_xb, (Nb, Db), dtype=jnp.float32)
    x_factor = jax.random.normal(k_xf, (Nf, Df), dtype=jnp.float32)
    params = make_params(k_p, Db, Df, K)

    ref = reference_forward(x_beta, x_factor, params)

    # f32 path: matches the PyTorch module's numerics.
    fwd_f32 = jax.jit(lambda xb, xf, p: ca2_forward(xb, xf, p))
    out = jax.block_until_ready(fwd_f32(x_beta, x_factor, params))
    assert out.shape == (Nb, Nf)
    np.testing.assert_allclose(np.asarray(out), np.asarray(ref), rtol=1e-4, atol=1e-5)

    # bf16 matmul-operand path (f32 accumulation): looser tolerance.
    fwd_bf16 = jax.jit(
        lambda xb, xf, p: ca2_forward(xb, xf, p, compute_dtype=jnp.bfloat16))
    out_bf16 = jax.block_until_ready(fwd_bf16(x_beta, x_factor, params))
    np.testing.assert_allclose(np.asarray(out_bf16), np.asarray(ref),
                               rtol=5e-2, atol=5e-2)

    print("KERNEL_OK")
</pallas_src>

<mosaic_0001>
module attributes {stable_mosaic.version = 11 : i64} {
  func.func @ca2_kernel(%arg0: i32, %arg1: i32, %arg2: memref<32x16xf32, #tpu.memory_space<vmem>>, %arg3: memref<128x8xf32, #tpu.memory_space<vmem>>, %arg4: memref<16x32xf32, #tpu.memory_space<vmem>>, %arg5: memref<32x16xf32, #tpu.memory_space<vmem>>, %arg6: memref<16x8xf32, #tpu.memory_space<vmem>>, %arg7: memref<8x8xf32, #tpu.memory_space<vmem>>, %arg8: memref<1x64xf32, #tpu.memory_space<vmem>>, %arg9: memref<32x128xf32, #tpu.memory_space<vmem>>) attributes {dimension_semantics = [#tpu.dimension_semantics<parallel>, #tpu.dimension_semantics<parallel>], iteration_bounds = array<i64: 1, 1>, scalar_prefetch = 0 : i64, scratch_operands = 0 : i64, tpu.core_type = #tpu.core_type<tc>, window_params = [{transform_indices = @transform_0, window_bounds = array<i64: 32, 16>}, {transform_indices = @transform_1, window_bounds = array<i64: 128, 8>}, {pipeline_mode = #tpu.pipeline_mode<synchronous>, transform_indices = @transform_2, window_bounds = array<i64: 16, 32>}, {pipeline_mode = #tpu.pipeline_mode<synchronous>, transform_indices = @transform_3, window_bounds = array<i64: 32, 16>}, {pipeline_mode = #tpu.pipeline_mode<synchronous>, transform_indices = @transform_4, window_bounds = array<i64: 16, 8>}, {pipeline_mode = #tpu.pipeline_mode<synchronous>, transform_indices = @transform_5, window_bounds = array<i64: 8, 8>}, {pipeline_mode = #tpu.pipeline_mode<synchronous>, transform_indices = @transform_6, window_bounds = array<i64: 1, 64>}, {transform_indices = @transform_7, window_bounds = array<i64: 32, 128>}]} {
    %c0 = arith.constant 0 : index
    %c0_0 = arith.constant 0 : index
    %0 = vector.load %arg8[%c0, %c0_0] : memref<1x64xf32, #tpu.memory_space<vmem>>, vector<1x64xf32>
    %1 = vector.extract_strided_slice %0 {offsets = [0, 0], sizes = [1, 32], strides = [1, 1]} : vector<1x64xf32> to vector<1x32xf32>
    %2 = vector.extract_strided_slice %0 {offsets = [0, 32], sizes = [1, 16], strides = [1, 1]} : vector<1x64xf32> to vector<1x16xf32>
    %3 = vector.extract_strided_slice %0 {offsets = [0, 48], sizes = [1, 8], strides = [1, 1]} : vector<1x64xf32> to vector<1x8xf32>
    %4 = vector.extract_strided_slice %0 {offsets = [0, 56], sizes = [1, 8], strides = [1, 1]} : vector<1x64xf32> to vector<1x8xf32>
    %c0_1 = arith.constant 0 : index
    %c0_2 = arith.constant 0 : index
    %5 = vector.load %arg2[%c0_1, %c0_2] : memref<32x16xf32, #tpu.memory_space<vmem>>, vector<32x16xf32>
    %c0_3 = arith.constant 0 : index
    %c0_4 = arith.constant 0 : index
    %6 = vector.load %arg4[%c0_3, %c0_4] : memref<16x32xf32, #tpu.memory_space<vmem>>, vector<16x32xf32>
    %cst = arith.constant dense<0.000000e+00> : vector<32x32xf32>
    %7 = tpu.matmul %5, %6, %cst {dimension_numbers = #tpu.dot_dimension_numbers<[1], [0], [0], [1], [0, 0, 1, 1], [], []>} : vector<32x16xf32>, vector<16x32xf32>, vector<32x32xf32> -> vector<32x32xf32>
    %8 = vector.broadcast %1 : vector<1x32xf32> to vector<32x32xf32>
    %9 = arith.addf %7, %8 : vector<32x32xf32>
    %cst_5 = arith.constant 0.000000e+00 : f32
    %10 = vector.broadcast %cst_5 : f32 to vector<32x32xf32>
    %11 = arith.maximumf %9, %10 : vector<32x32xf32>
    %c0_6 = arith.constant 0 : index
    %c0_7 = arith.constant 0 : index
    %12 = vector.load %arg5[%c0_6, %c0_7] : memref<32x16xf32, #tpu.memory_space<vmem>>, vector<32x16xf32>
    %cst_8 = arith.constant dense<0.000000e+00> : vector<32x16xf32>
    %13 = tpu.matmul %11, %12, %cst_8 {dimension_numbers = #tpu.dot_dimension_numbers<[1], [0], [0], [1], [0, 0, 1, 1], [], []>} : vector<32x32xf32>, vector<32x16xf32>, vector<32x16xf32> -> vector<32x16xf32>
    %14 = vector.broadcast %2 : vector<1x16xf32> to vector<32x16xf32>
    %15 = arith.addf %13, %14 : vector<32x16xf32>
    %cst_9 = arith.constant 0.000000e+00 : f32
    %16 = vector.broadcast %cst_9 : f32 to vector<32x16xf32>
    %17 = arith.maximumf %15, %16 : vector<32x16xf32>
    %c0_10 = arith.constant 0 : index
    %c0_11 = arith.constant 0 : index
    %18 = vector.load %arg3[%c0_10, %c0_11] : memref<128x8xf32, #tpu.memory_space<vmem>>, vector<128x8xf32>
    %c0_12 = arith.constant 0 : index
    %c0_13 = arith.constant 0 : index
    %19 = vector.load %arg7[%c0_12, %c0_13] : memref<8x8xf32, #tpu.memory_space<vmem>>, vector<8x8xf32>
    %cst_14 = arith.constant dense<0.000000e+00> : vector<128x8xf32>
    %20 = tpu.matmul %18, %19, %cst_14 {dimension_numbers = #tpu.dot_dimension_numbers<[1], [0], [0], [1], [0, 0, 1, 1], [], []>} : vector<128x8xf32>, vector<8x8xf32>, vector<128x8xf32> -> vector<128x8xf32>
    %21 = vector.broadcast %3 : vector<1x8xf32> to vector<128x8xf32>
    %22 = arith.addf %20, %21 : vector<128x8xf32>
    %c0_15 = arith.constant 0 : index
    %c0_16 = arith.constant 0 : index
    %23 = vector.load %arg6[%c0_15, %c0_16] : memref<16x8xf32, #tpu.memory_space<vmem>>, vector<16x8xf32>
    %cst_17 = arith.constant dense<0.000000e+00> : vector<16x128xf32>
    %24 = tpu.matmul %23, %22, %cst_17 {dimension_numbers = #tpu.dot_dimension_numbers<[1], [1], [0], [0], [0, 0, 1, 0], [], []>} : vector<16x8xf32>, vector<128x8xf32>, vector<16x128xf32> -> vector<16x128xf32>
    %cst_18 = arith.constant dense<0.000000e+00> : vector<1x128xf32>
    %25 = tpu.matmul %4, %22, %cst_18 {dimension_numbers = #tpu.dot_dimension_numbers<[1], [1], [0], [0], [0, 0, 1, 0], [], []>} : vector<1x8xf32>, vector<128x8xf32>, vector<1x128xf32> -> vector<1x128xf32>
    %cst_19 = arith.constant dense<0.000000e+00> : vector<32x128xf32>
    %26 = tpu.matmul %17, %24, %cst_19 {dimension_numbers = #tpu.dot_dimension_numbers<[1], [0], [0], [1], [0, 0, 1, 1], [], []>} : vector<32x16xf32>, vector<16x128xf32>, vector<32x128xf32> -> vector<32x128xf32>
    %27 = vector.broadcast %25 : vector<1x128xf32> to vector<32x128xf32>
    %28 = arith.addf %26, %27 : vector<32x128xf32>
    %c0_20 = arith.constant 0 : index
    %c0_21 = arith.constant 0 : index
    %29 = vector.load %arg9[%c0_20, %c0_21] : memref<32x128xf32, #tpu.memory_space<vmem>>, vector<32x128xf32>
    tpu.vector_store %arg9[%c0_20, %c0_21], %28 {strides = array<i32>} : memref<32x128xf32, #tpu.memory_space<vmem>>, vector<32x128xf32>,
    return
  }
  func.func @transform_0(%arg0: i32, %arg1: i32) -> (i32, i32) {
    %c0_i32 = arith.constant 0 : i32
    %c0_i32_0 = arith.constant 0 : i32
    return %arg0, %c0_i32 : i32, i32
  }
  func.func @transform_1(%arg0: i32, %arg1: i32) -> (i32, i32) {
    %c0_i32 = arith.constant 0 : i32
    %c0_i32_0 = arith.constant 0 : i32
    return %arg1, %c0_i32 : i32, i32
  }
  func.func @transform_2(%arg0: i32, %arg1: i32) -> (i32, i32) {
    %c0_i32 = arith.constant 0 : i32
    %c0_i32_0 = arith.constant 0 : i32
    %c0_i32_1 = arith.constant 0 : i32
    return %c0_i32, %c0_i32_0 : i32, i32
  }
  func.func @transform_3(%arg0: i32, %arg1: i32) -> (i32, i32) {
    %c0_i32 = arith.constant 0 : i32
    %c0_i32_0 = arith.constant 0 : i32
    %c0_i32_1 = arith.constant 0 : i32
    return %c0_i32, %c0_i32_0 : i32, i32
  }
  func.func @transform_4(%arg0: i32, %arg1: i32) -> (i32, i32) {
    %c0_i32 = arith.constant 0 : i32
    %c0_i32_0 = arith.constant 0 : i32
    %c0_i32_1 = arith.constant 0 : i32
    return %c0_i32, %c0_i32_0 : i32, i32
  }
  func.func @transform_5(%arg0: i32, %arg1: i32) -> (i32, i32) {
    %c0_i32 = arith.constant 0 : i32
    %c0_i32_0 = arith.constant 0 : i32
    %c0_i32_1 = arith.constant 0 : i32
    return %c0_i32, %c0_i32_0 : i32, i32
  }
  func.func @transform_6(%arg0: i32, %arg1: i32) -> (i32, i32) {
    %c0_i32 = arith.constant 0 : i32
    %c0_i32_0 = arith.constant 0 : i32
    %c0_i32_1 = arith.constant 0 : i32
    return %c0_i32, %c0_i32_0 : i32, i32
  }
  func.func @transform_7(%arg0: i32, %arg1: i32) -> (i32, i32) {
    %c0_i32 = arith.constant 0 : i32
    return %arg0, %arg1 : i32, i32
  }
}

</mosaic_0001>

<llo_original>
// kernel: _lambda_.1
$region0: #{_lambda_.1}
  #allocation0 [shape = 'u32[]', space=smem, size = 0x4, offset = 0x4, fixed_abs, tag = 'smem constant byte address 0x4 - core index']
  #allocation1 [shape = 'u32[144,128]{1,0:T(1,128)}', space=vmem, size = 0x12000, scoped, tag = 'internal scratch']
  %s0 = inlined_call_operand.vmem [shape: f32[32,16], index: 0, kind: input, shape index: {}]
  %s1 = inlined_call_operand.vmem [shape: f32[128,8], index: 1, kind: input, shape index: {}]
  %s2 = inlined_call_operand.vmem [shape: f32[16,32], index: 2, kind: input, shape index: {}]
  %s3 = inlined_call_operand.vmem [shape: f32[32,16], index: 3, kind: input, shape index: {}]
  %s4 = inlined_call_operand.vmem [shape: f32[16,8], index: 4, kind: input, shape index: {}]
  %s5 = inlined_call_operand.vmem [shape: f32[8,8], index: 5, kind: input, shape index: {}]
  %s6 = inlined_call_operand.vmem [shape: f32[1,64], index: 6, kind: input, shape index: {}]
  %s7 = inlined_call_operand.vmem [shape: f32[32,128], index: 7, kind: output, shape index: {}]
  %s8 = sld [smem:[#allocation0]]
  $region38: #{_lambda_.1} parent=0
    _
  %s10 = ssub.s32 1, %s8
  %s11 = scalar_select 0, %s10, %s8
  // Predicated region
  $region2: #{_lambda_.1} parent=0 // pred_check
    _
  $region3: #{_lambda_.1} parent=0 // pred_check_branch
    %13 = sbr.rel (0) target = $region5
  $region4: #{_lambda_.1} parent=0 // pred_region
    _
  $region5: #{_lambda_.1} parent=0 // pred_fallthru
    _
  // Predicated region
  $region6: #{_lambda_.1} parent=0 // pred_check
    _
  $region7: #{_lambda_.1} parent=0 // pred_check_branch
    %15 = sbr.rel (0) target = $region9
  $region8: #{_lambda_.1} parent=0 // pred_region
    _
  $region9: #{_lambda_.1} parent=0 // pred_fallthru
    _
  // Predicated region
  $region10: #{_lambda_.1} parent=0 // pred_check
    _
  $region11: #{_lambda_.1} parent=0 // pred_check_branch
    %17 = sbr.rel (0) target = $region13
  $region12: #{_lambda_.1} parent=0 // pred_region
    _
  $region13: #{_lambda_.1} parent=0 // pred_fallthru
    _
  // Predicated region
  $region14: #{_lambda_.1} parent=0 // pred_check
    _
  $region15: #{_lambda_.1} parent=0 // pred_check_branch
    %19 = sbr.rel (0) target = $region17
  $region16: #{_lambda_.1} parent=0 // pred_region
    _
  $region17: #{_lambda_.1} parent=0 // pred_fallthru
    _
  // Predicated region
  $region18: #{_lambda_.1} parent=0 // pred_check
    _
  $region19: #{_lambda_.1} parent=0 // pred_check_branch
    %21 = sbr.rel (0) target = $region21
  $region20: #{_lambda_.1} parent=0 // pred_region
    _
  $region21: #{_lambda_.1} parent=0 // pred_fallthru
    _
  // Predicated region
  $region22: #{_lambda_.1} parent=0 // pred_check
    _
  $region23: #{_lambda_.1} parent=0 // pred_check_branch
    %23 = sbr.rel (0) target = $region25
  $region24: #{_lambda_.1} parent=0 // pred_region
    _
  $region25: #{_lambda_.1} parent=0 // pred_fallthru
    _
  // Predicated region
  $region26: #{_lambda_.1} parent=0 // pred_check
    _
  $region27: #{_lambda_.1} parent=0 // pred_check_branch
    %25 = sbr.rel (0) target = $region29
  $region28: #{_lambda_.1} parent=0 // pred_region
    _
  $region29: #{_lambda_.1} parent=0 // pred_fallthru
    _
  %v26 = vld [vmem:[%s6] sm:$0x1]
  %v27 = vld [vmem:[%s0] sm:$0xff]
  %v28 = vld [vmem:[%s0 + $0x8] sm:$0xff]
  %v29 = vld [vmem:[%s0 + $0x10] sm:$0xff]
  %v30 = vld [vmem:[%s0 + $0x18] sm:$0xff]
  %v31 = vld [vmem:[%s2] sm:$0xff]
  %v32 = vld [vmem:[%s2 + $0x8] sm:$0xff]
  %v34 = vlaneseq
  %v35 = vshrl.u32 %v34, 7
  %v36 = vsub.s32 0, %v35
  %v37 = vrot.slane %v26, %v36
  %vm39 = vcmask 130048
  %v41 = vsel %vm39, %v27, 0
  %v44 = vsel %vm39, %v28, 0
  %v47 = vsel %vm39, %v29, 0
  %v50 = vsel %vm39, %v30, 0
  %52 = vmatprep.subr.mxu0 0.0
  %53 = vmatpush1.msra.mxu0 %v31
  %54 = vmatprep.subr.mxu0 0.0
  %55 = vmatpush1.msra.mxu0 %v32
  %56 = vmatprep.subr.mxu0 0.0
  %57 = vmatpush1.msra.mxu0 0.0
  %58 = vmatprep.subr.mxu0 0.0
  %59 = vmatpush1.msra.mxu0 0.0
  %60 = vmatprep.subr.mxu0 0.0
  %61 = vmatpush1.msra.mxu0 0.0
  %62 = vmatprep.subr.mxu0 0.0
  %63 = vmatpush1.msra.mxu0 0.0
  %64 = vmatprep.subr.mxu0 0.0
  %65 = vmatpush1.msra.mxu0 0.0
  %66 = vmatprep.subr.mxu0 0.0
  %67 = vmatpush1.msra.mxu0 0.0
  %68 = vmatprep.subr.mxu0 0.0
  %69 = vmatpush1.msra.mxu0 0.0
  %70 = vmatprep.subr.mxu0 0.0
  %71 = vmatpush1.msra.mxu0 0.0
  %72 = vmatprep.subr.mxu0 0.0
  %73 = vmatpush1.msra.mxu0 0.0
  %74 = vmatprep.subr.mxu0 0.0
  %75 = vmatpush1.msra.mxu0 0.0
  %76 = vmatprep.subr.mxu0 0.0
  %77 = vmatpush1.msra.mxu0 0.0
  %78 = vmatprep.subr.mxu0 0.0
  %79 = vmatpush1.msra.mxu0 0.0
  %80 = vmatprep.subr.mxu0 0.0
  %81 = vmatpush1.msra.mxu0 0.0
  %82 = vmatprep.subr.mxu0 0.0
  %83 = vmatpush1.msra.mxu0 0.0
  %84 = vmatprep.subr.mxu0 0.0
  %85 = vmatpush1.msra.mxu0 0.0
  %86 = vmatprep.subr.mxu0 0.0
  %87 = vmatpush1.msra.mxu0 0.0
  %88 = vmatprep.subr.mxu0 0.0
  %89 = vmatpush1.msra.mxu0 0.0
  %90 = vmatprep.subr.mxu0 0.0
  %91 = vmatpush1.msra.mxu0 0.0
  %92 = vmatprep.subr.mxu0 0.0
  %93 = vmatpush1.msra.mxu0 0.0
  %94 = vmatprep.subr.mxu0 0.0
  %95 = vmatpush1.msra.mxu0 0.0
  %96 = vmatprep.subr.mxu0 0.0
  %97 = vmatpush1.msra.mxu0 0.0
  %98 = vmatprep.subr.mxu0 0.0
  %99 = vmatpush1.msra.mxu0 0.0
  %100 = vmatprep.subr.mxu0 0.0
  %101 = vmatpush1.msra.mxu0 0.0
  %102 = vmatprep.subr.mxu0 0.0
  %103 = vmatpush1.msra.mxu0 0.0
  %104 = vmatprep.subr.mxu0 0.0
  %105 = vmatpush1.msra.mxu0 0.0
  %106 = vmatprep.subr.mxu0 0.0
  %107 = vmatpush1.msra.mxu0 0.0
  %108 = vmatprep.subr.mxu0 0.0
  %109 = vmatpush1.msra.mxu0 0.0
  %110 = vmatprep.subr.mxu0 0.0
  %111 = vmatpush1.msra.mxu0 0.0
  %112 = vmatprep.subr.mxu0 0.0
  %113 = vmatpush1.msra.mxu0 0.0
  %114 = vmatprep.subr.mxu0 0.0
  %115 = vmatpush1.msra.mxu0 0.0
  %116 = vmatprep.mubr.f32.mxu0 0.0
  %117 = vmatmul.mubr.f32.gmra.mrb[0].mxu0 %v41
  %v118 = vpop.f32.mrb[0].mxu0
  %v119 = vadd.f32 %v37, %v118
  %v120 = vpop.f32.mrb[0].mxu0
  %121 = vmatprep.mubr.f32.mxu0 0.0
  %122 = vmatmul.mubr.f32.gmra.mrb[0].mxu0 %v44
  %v123 = vpop.f32.mrb[0].mxu0
  %v124 = vadd.f32 %v37, %v123
  %v125 = vpop.f32.mrb[0].mxu0
  %126 = vmatprep.mubr.f32.mxu0 0.0
  %127 = vmatmul.mubr.f32.gmra.mrb[0].mxu0 %v47
  %v128 = vpop.f32.mrb[0].mxu0
  %v129 = vadd.f32 %v37, %v128
  %v130 = vpop.f32.mrb[0].mxu0
  %131 = vmatprep.mubr.f32.mxu0 0.0
  %132 = vmatmul.mubr.f32.gmra.mrb[0].mxu0 %v50
  %v133 = vpop.f32.mrb[0].mxu0
  %v134 = vadd.f32 %v37, %v133
  %v135 = vpop.f32.mrb[0].mxu0
  %136 = vdwg.mxu0
  %v137 = vmax.f32 %v119, 0.0
  %v138 = vmax.f32 %v124, 0.0
  %v139 = vmax.f32 %v129, 0.0
  %v140 = vmax.f32 %v134, 0.0
  %v141 = vld [vmem:[%s3] sm:$0xff]
  %v142 = vld [vmem:[%s3 + $0x8] sm:$0xff]
  %v143 = vld [vmem:[%s3 + $0x10] sm:$0xff]
  %v144 = vld [vmem:[%s3 + $0x18] sm:$0xff]
  %145 = vrot.lane.b32.xlu0 %v37, 96
  %v146 = vpop.permute.xlu0 %145
  %vm148 = vcmask 261120
  %v150 = vsel %vm148, %v137, 0
  %v153 = vsel %vm148, %v138, 0
  %v156 = vsel %vm148, %v139, 0
  %v159 = vsel %vm148, %v140, 0
  %161 = vmatprep.subr.mxu0 0.0
  %162 = vmatpush1.msra.mxu0 %v141
  %163 = vmatprep.subr.mxu0 0.0
  %164 = vmatpush1.msra.mxu0 %v142
  %165 = vmatprep.subr.mxu0 0.0
  %166 = vmatpush1.msra.mxu0 %v143
  %167 = vmatprep.subr.mxu0 0.0
  %168 = vmatpush1.msra.mxu0 %v144
  %169 = vmatprep.subr.mxu0 0.0
  %170 = vmatpush1.msra.mxu0 0.0
  %171 = vmatprep.subr.mxu0 0.0
  %172 = vmatpush1.msra.mxu0 0.0
  %173 = vmatprep.subr.mxu0 0.0
  %174 = vmatpush1.msra.mxu0 0.0
  %175 = vmatprep.subr.mxu0 0.0
  %176 = vmatpush1.msra.mxu0 0.0
  %177 = vmatprep.subr.mxu0 0.0
  %178 = vmatpush1.msra.mxu0 0.0
  %179 = vmatprep.subr.mxu0 0.0
  %180 = vmatpush1.msra.mxu0 0.0
  %181 = vmatprep.subr.mxu0 0.0
  %182 = vmatpush1.msra.mxu0 0.0
  %183 = vmatprep.subr.mxu0 0.0
  %184 = vmatpush1.msra.mxu0 0.0
  %185 = vmatprep.subr.mxu0 0.0
  %186 = vmatpush1.msra.mxu0 0.0
  %187 = vmatprep.subr.mxu0 0.0
  %188 = vmatpush1.msra.mxu0 0.0
  %189 = vmatprep.subr.mxu0 0.0
  %190 = vmatpush1.msra.mxu0 0.0
  %191 = vmatprep.subr.mxu0 0.0
  %192 = vmatpush1.msra.mxu0 0.0
  %193 = vmatprep.subr.mxu0 0.0
  %194 = vmatpush1.msra.mxu0 0.0
  %195 = vmatprep.subr.mxu0 0.0
  %196 = vmatpush1.msra.mxu0 0.0
  %197 = vmatprep.subr.mxu0 0.0
  %198 = vmatpush1.msra.mxu0 0.0
  %199 = vmatprep.subr.mxu0 0.0
  %200 = vmatpush1.msra.mxu0 0.0
  %201 = vmatprep.subr.mxu0 0.0
  %202 = vmatpush1.msra.mxu0 0.0
  %203 = vmatprep.subr.mxu0 0.0
  %204 = vmatpush1.msra.mxu0 0.0
  %205 = vmatprep.subr.mxu0 0.0
  %206 = vmatpush1.msra.mxu0 0.0
  %207 = vmatprep.subr.mxu0 0.0
  %208 = vmatpush1.msra.mxu0 0.0
  %209 = vmatprep.subr.mxu0 0.0
  %210 = vmatpush1.msra.mxu0 0.0
  %211 = vmatprep.subr.mxu0 0.0
  %212 = vmatpush1.msra.mxu0 0.0
  %213 = vmatprep.subr.mxu0 0.0
  %214 = vmatpush1.msra.mxu0 0.0
  %215 = vmatprep.subr.mxu0 0.0
  %216 = vmatpush1.msra.mxu0 0.0
  %217 = vmatprep.subr.mxu0 0.0
  %218 = vmatpush1.msra.mxu0 0.0
  %219 = vmatprep.subr.mxu0 0.0
  %220 = vmatpush1.msra.mxu0 0.0
  %221 = vmatprep.subr.mxu0 0.0
  %222 = vmatpush1.msra.mxu0 0.0
  %223 = vmatprep.subr.mxu0 0.0
  %224 = vmatpush1.msra.mxu0 0.0
  %225 = vmatprep.mubr.f32.mxu0 0.0
  %226 = vmatmul.mubr.f32.gmra.mrb[0].mxu0 %v150
  %v227 = vpop.f32.mrb[0].mxu0
  %v228 = vadd.f32 %v146, %v227
  %v229 = vpop.f32.mrb[0].mxu0
  %230 = vmatprep.mubr.f32.mxu0 0.0
  %231 = vmatmul.mubr.f32.gmra.mrb[0].mxu0 %v153
  %v232 = vpop.f32.mrb[0].mxu0
  %v233 = vadd.f32 %v146, %v232
  %v234 = vpop.f32.mrb[0].mxu0
  %235 = vmatprep.mubr.f32.mxu0 0.0
  %236 = vmatmul.mubr.f32.gmra.mrb[0].mxu0 %v156
  %v237 = vpop.f32.mrb[0].mxu0
  %v238 = vadd.f32 %v146, %v237
  %v239 = vpop.f32.mrb[0].mxu0
  %240 = vmatprep.mubr.f32.mxu0 0.0
  %241 = vmatmul.mubr.f32.gmra.mrb[0].mxu0 %v159
  %v242 = vpop.f32.mrb[0].mxu0
  %v243 = vadd.f32 %v146, %v242
  %v244 = vpop.f32.mrb[0].mxu0
  %245 = vdwg.mxu0
  %v246 = vmax.f32 %v228, 0.0
  %v247 = vmax.f32 %v233, 0.0
  %v248 = vmax.f32 %v238, 0.0
  %v249 = vmax.f32 %v243, 0.0
  %v250 = vld [vmem:[%s1] sm:$0xff]
  %v251 = vld [vmem:[%s1 + $0x8] sm:$0xff]
  %v252 = vld [vmem:[%s1 + $0x10] sm:$0xff]
  %v253 = vld [vmem:[%s1 + $0x18] sm:$0xff]
  %v254 = vld [vmem:[%s1 + $0x20] sm:$0xff]
  %v255 = vld [vmem:[%s1 + $0x28] sm:$0xff]
  %v256 = vld [vmem:[%s1 + $0x30] sm:$0xff]
  %v257 = vld [vmem:[%s1 + $0x38] sm:$0xff]
  %v258 = vld [vmem:[%s1 + $0x40] sm:$0xff]
  %v259 = vld [vmem:[%s1 + $0x48] sm:$0xff]
  %v260 = vld [vmem:[%s1 + $0x50] sm:$0xff]
  %v261 = vld [vmem:[%s1 + $0x58] sm:$0xff]
  %v262 = vld [vmem:[%s1 + $0x60] sm:$0xff]
  %v263 = vld [vmem:[%s1 + $0x68] sm:$0xff]
  %v264 = vld [vmem:[%s1 + $0x70] sm:$0xff]
  %v265 = vld [vmem:[%s1 + $0x78] sm:$0xff]
  %v266 = vld [vmem:[%s5] sm:$0xff]
  %267 = vrot.lane.b32.xlu0 %v37, 80
  %v268 = vpop.permute.xlu0 %267
  %vm270 = vcmask 64512
  %v272 = vsel %vm270, %v250, 0
  %v275 = vsel %vm270, %v251, 0
  %v278 = vsel %vm270, %v252, 0
  %v281 = vsel %vm270, %v253, 0
  %v284 = vsel %vm270, %v254, 0
  %v287 = vsel %vm270, %v255, 0
  %v290 = vsel %vm270, %v256, 0
  %v293 = vsel %vm270, %v257, 0
  %v296 = vsel %vm270, %v258, 0
  %v299 = vsel %vm270, %v259, 0
  %v302 = vsel %vm270, %v260, 0
  %v305 = vsel %vm270, %v261, 0
  %v308 = vsel %vm270, %v262, 0
  %v311 = vsel %vm270, %v263, 0
  %v314 = vsel %vm270, %v264, 0
  %v317 = vsel %vm270, %v265, 0
  %319 = vmatprep.subr.mxu0 0.0
  %320 = vmatpush1.msra.mxu0 %v266
  %321 = vmatprep.subr.mxu0 0.0
  %322 = vmatpush1.msra.mxu0 0.0
  %323 = vmatprep.subr.mxu0 0.0
  %324 = vmatpush1.msra.mxu0 0.0
  %325 = vmatprep.subr.mxu0 0.0
  %326 = vmatpush1.msra.mxu0 0.0
  %327 = vmatprep.subr.mxu0 0.0
  %328 = vmatpush1.msra.mxu0 0.0
  %329 = vmatprep.subr.mxu0 0.0
  %330 = vmatpush1.msra.mxu0 0.0
  %331 = vmatprep.subr.mxu0 0.0
  %332 = vmatpush1.msra.mxu0 0.0
  %333 = vmatprep.subr.mxu0 0.0
  %334 = vmatpush1.msra.mxu0 0.0
  %335 = vmatprep.subr.mxu0 0.0
  %336 = vmatpush1.msra.mxu0 0.0
  %337 = vmatprep.subr.mxu0 0.0
  %338 = vmatpush1.msra.mxu0 0.0
  %339 = vmatprep.subr.mxu0 0.0
  %340 = vmatpush1.msra.mxu0 0.0
  %341 = vmatprep.subr.mxu0 0.0
  %342 = vmatpush1.msra.mxu0 0.0
  %343 = vmatprep.subr.mxu0 0.0
  %344 = vmatpush1.msra.mxu0 0.0
  %345 = vmatprep.subr.mxu0 0.0
  %346 = vmatpush1.msra.mxu0 0.0
  %347 = vmatprep.subr.mxu0 0.0
  %348 = vmatpush1.msra.mxu0 0.0
  %349 = vmatprep.subr.mxu0 0.0
  %350 = vmatpush1.msra.mxu0 0.0
  %351 = vmatprep.subr.mxu0 0.0
  %352 = vmatpush1.msra.mxu0 0.0
  %353 = vmatprep.subr.mxu0 0.0
  %354 = vmatpush1.msra.mxu0 0.0
  %355 = vmatprep.subr.mxu0 0.0
  %356 = vmatpush1.msra.mxu0 0.0
  %357 = vmatprep.subr.mxu0 0.0
  %358 = vmatpush1.msra.mxu0 0.0
  %359 = vmatprep.subr.mxu0 0.0
  %360 = vmatpush1.msra.mxu0 0.0
  %361 = vmatprep.subr.mxu0 0.0
  %362 = vmatpush1.msra.mxu0 0.0
  %363 = vmatprep.subr.mxu0 0.0
  %364 = vmatpush1.msra.mxu0 0.0
  %365 = vmatprep.subr.mxu0 0.0
  %366 = vmatpush1.msra.mxu0 0.0
  %367 = vmatprep.subr.mxu0 0.0
  %368 = vmatpush1.msra.mxu0 0.0
  %369 = vmatprep.subr.mxu0 0.0
  %370 = vmatpush1.msra.mxu0 0.0
  %371 = vmatprep.subr.mxu0 0.0
  %372 = vmatpush1.msra.mxu0 0.0
  %373 = vmatprep.subr.mxu0 0.0
  %374 = vmatpush1.msra.mxu0 0.0
  %375 = vmatprep.subr.mxu0 0.0
  %376 = vmatpush1.msra.mxu0 0.0
  %377 = vmatprep.subr.mxu0 0.0
  %378 = vmatpush1.msra.mxu0 0.0
  %379 = vmatprep.subr.mxu0 0.0
  %380 = vmatpush1.msra.mxu0 0.0
  %381 = vmatprep.subr.mxu0 0.0
  %382 = vmatpush1.msra.mxu0 0.0
  %383 = vmatprep.mubr.f32.mxu0 0.0
  %384 = vmatmul.mubr.f32.gmra.mrb[0].mxu0 %v272
  %v385 = vpop.f32.mrb[0].mxu0
  %v386 = vadd.f32 %v268, %v385
  %v387 = vpop.f32.mrb[0].mxu0
  %388 = vmatprep.mubr.f32.mxu0 0.0
  %389 = vmatmul.mubr.f32.gmra.mrb[0].mxu0 %v275
  %v390 = vpop.f32.mrb[0].mxu0
  %v391 = vadd.f32 %v268, %v390
  %v392 = vpop.f32.mrb[0].mxu0
  %393 = vmatprep.mubr.f32.mxu0 0.0
  %394 = vmatmul.mubr.f32.gmra.mrb[0].mxu0 %v278
  %v395 = vpop.f32.mrb[0].mxu0
  %v396 = vadd.f32 %v268, %v395
  %v397 = vpop.f32.mrb[0].mxu0
  %398 = vmatprep.mubr.f32.mxu0 0.0
  %399 = vmatmul.mubr.f32.gmra.mrb[0].mxu0 %v281
  %v400 = vpop.f32.mrb[0].mxu0
  %v401 = vadd.f32 %v268, %v400
  %v402 = vpop.f32.mrb[0].mxu0
  %403 = vmatprep.mubr.f32.mxu0 0.0
  %404 = vmatmul.mubr.f32.gmra.mrb[0].mxu0 %v284
  %v405 = vpop.f32.mrb[0].mxu0
  %v406 = vadd.f32 %v268, %v405
  %v407 = vpop.f32.mrb[0].mxu0
  %408 = vmatprep.mubr.f32.mxu0 0.0
  %409 = vmatmul.mubr.f32.gmra.mrb[0].mxu0 %v287
  %v410 = vpop.f32.mrb[0].mxu0
  %v411 = vadd.f32 %v268, %v410
  %v412 = vpop.f32.mrb[0].mxu0
  %413 = vmatprep.mubr.f32.mxu0 0.0
  %414 = vmatmul.mubr.f32.gmra.mrb[0].mxu0 %v290
  %v415 = vpop.f32.mrb[0].mxu0
  %v416 = vadd.f32 %v268, %v415
  %v417 = vpop.f32.mrb[0].mxu0
  %418 = vmatprep.mubr.f32.mxu0 0.0
  %419 = vmatmul.mubr.f32.gmra.mrb[0].mxu0 %v293
  %v420 = vpop.f32.mrb[0].mxu0
  %v421 = vadd.f32 %v268, %v420
  %v422 = vpop.f32.mrb[0].mxu0
  %423 = vmatprep.mubr.f32.mxu0 0.0
  %424 = vmatmul.mubr.f32.gmra.mrb[0].mxu0 %v296
  %v425 = vpop.f32.mrb[0].mxu0
  %v426 = vadd.f32 %v268, %v425
  %v427 = vpop.f32.mrb[0].mxu0
  %428 = vmatprep.mubr.f32.mxu0 0.0
  %429 = vmatmul.mubr.f32.gmra.mrb[0].mxu0 %v299
  %v430 = vpop.f32.mrb[0].mxu0
  %v431 = vadd.f32 %v268, %v430
  %v432 = vpop.f32.mrb[0].mxu0
  %433 = vmatprep.mubr.f32.mxu0 0.0
  %434 = vmatmul.mubr.f32.gmra.mrb[0].mxu0 %v302
  %v435 = vpop.f32.mrb[0].mxu0
  %v436 = vadd.f32 %v268, %v435
  %v437 = vpop.f32.mrb[0].mxu0
  %438 = vmatprep.mubr.f32.mxu0 0.0
  %439 = vmatmul.mubr.f32.gmra.mrb[0].mxu0 %v305
  %v440 = vpop.f32.mrb[0].mxu0
  %v441 = vadd.f32 %v268, %v440
  %v442 = vpop.f32.mrb[0].mxu0
  %443 = vmatprep.mubr.f32.mxu0 0.0
  %444 = vmatmul.mubr.f32.gmra.mrb[0].mxu0 %v308
  %v445 = vpop.f32.mrb[0].mxu0
  %v446 = vadd.f32 %v268, %v445
  %v447 = vpop.f32.mrb[0].mxu0
  %448 = vmatprep.mubr.f32.mxu0 0.0
  %449 = vmatmul.mubr.f32.gmra.mrb[0].mxu0 %v311
  %v450 = vpop.f32.mrb[0].mxu0
  %v451 = vadd.f32 %v268, %v450
  %v452 = vpop.f32.mrb[0].mxu0
  %453 = vmatprep.mubr.f32.mxu0 0.0
  %454 = vmatmul.mubr.f32.gmra.mrb[0].mxu0 %v314
  %v455 = vpop.f32.mrb[0].mxu0
  %v456 = vadd.f32 %v268, %v455
  %v457 = vpop.f32.mrb[0].mxu0
  %458 = vmatprep.mubr.f32.mxu0 0.0
  %459 = vmatmul.mubr.f32.gmra.mrb[0].mxu0 %v317
  %v460 = vpop.f32.mrb[0].mxu0
  %v461 = vadd.f32 %v268, %v460
  %v462 = vpop.f32.mrb[0].mxu0
  %463 = vdwg.mxu0
  %v464 = vld [vmem:[%s4] sm:$0xff]
  %v465 = vld [vmem:[%s4 + $0x8] sm:$0xff]
  %v467 = vsel %vm270, %v464, 0
  %v470 = vsel %vm270, %v465, 0
  %v473 = vsel %vm270, %v386, 0
  %v476 = vsel %vm270, %v391, 0
  %v479 = vsel %vm270, %v396, 0
  %v482 = vsel %vm270, %v401, 0
  %v485 = vsel %vm270, %v406, 0
  %v488 = vsel %vm270, %v411, 0
  %v491 = vsel %vm270, %v416, 0
  %v494 = vsel %vm270, %v421, 0
  %v497 = vsel %vm270, %v426, 0
  %v500 = vsel %vm270, %v431, 0
  %v503 = vsel %vm270, %v436, 0
  %v506 = vsel %vm270, %v441, 0
  %v509 = vsel %vm270, %v446, 0
  %v512 = vsel %vm270, %v451, 0
  %v515 = vsel %vm270, %v456, 0
  %v518 = vsel %vm270, %v461, 0
  %520 = vmatprep.subr.mxu0 0.0
  %521 = vmatpush1.xpose.msra.mxu0 %v473
  %522 = vmatprep.subr.mxu0 0.0
  %523 = vmatpush1.xpose.msra.mxu0 %v476
  %524 = vmatprep.subr.mxu0 0.0
  %525 = vmatpush1.xpose.msra.mxu0 %v479
  %526 = vmatprep.subr.mxu0 0.0
  %527 = vmatpush1.xpose.msra.mxu0 %v482
  %528 = vmatprep.subr.mxu0 0.0
  %529 = vmatpush1.xpose.msra.mxu0 %v485
  %530 = vmatprep.subr.mxu0 0.0
  %531 = vmatpush1.xpose.msra.mxu0 %v488
  %532 = vmatprep.subr.mxu0 0.0
  %533 = vmatpush1.xpose.msra.mxu0 %v491
  %534 = vmatprep.subr.mxu0 0.0
  %535 = vmatpush1.xpose.msra.mxu0 %v494
  %536 = vmatprep.subr.mxu0 0.0
  %537 = vmatpush1.xpose.msra.mxu0 %v497
  %538 = vmatprep.subr.mxu0 0.0
  %539 = vmatpush1.xpose.msra.mxu0 %v500
  %540 = vmatprep.subr.mxu0 0.0
  %541 = vmatpush1.xpose.msra.mxu0 %v503
  %542 = vmatprep.subr.mxu0 0.0
  %543 = vmatpush1.xpose.msra.mxu0 %v506
  %544 = vmatprep.subr.mxu0 0.0
  %545 = vmatpush1.xpose.msra.mxu0 %v509
  %546 = vmatprep.subr.mxu0 0.0
  %547 = vmatpush1.xpose.msra.mxu0 %v512
  %548 = vmatprep.subr.mxu0 0.0
  %549 = vmatpush1.xpose.msra.mxu0 %v515
  %550 = vmatprep.subr.mxu0 0.0
  %551 = vmatpush1.xpose.msra.mxu0 %v518
  %552 = vmatprep.subr.mxu0 0.0
  %553 = vmatpush1.xpose.msra.mxu0 0.0
  %554 = vmatprep.subr.mxu0 0.0
  %555 = vmatpush1.xpose.msra.mxu0 0.0
  %556 = vmatprep.subr.mxu0 0.0
  %557 = vmatpush1.xpose.msra.mxu0 0.0
  %558 = vmatprep.subr.mxu0 0.0
  %559 = vmatpush1.xpose.msra.mxu0 0.0
  %560 = vmatprep.subr.mxu0 0.0
  %561 = vmatpush1.xpose.msra.mxu0 0.0
  %562 = vmatprep.subr.mxu0 0.0
  %563 = vmatpush1.xpose.msra.mxu0 0.0
  %564 = vmatprep.subr.mxu0 0.0
  %565 = vmatpush1.xpose.msra.mxu0 0.0
  %566 = vmatprep.subr.mxu0 0.0
  %567 = vmatpush1.xpose.msra.mxu0 0.0
  %568 = vmatprep.subr.mxu0 0.0
  %569 = vmatpush1.xpose.msra.mxu0 0.0
  %570 = vmatprep.subr.mxu0 0.0
  %571 = vmatpush1.xpose.msra.mxu0 0.0
  %572 = vmatprep.subr.mxu0 0.0
  %573 = vmatpush1.xpose.msra.mxu0 0.0
  %574 = vmatprep.subr.mxu0 0.0
  %575 = vmatpush1.xpose.msra.mxu0 0.0
  %576 = vmatprep.subr.mxu0 0.0
  %577 = vmatpush1.xpose.msra.mxu0 0.0
  %578 = vmatprep.subr.mxu0 0.0
  %579 = vmatpush1.xpose.msra.mxu0 0.0
  %580 = vmatprep.subr.mxu0 0.0
  %581 = vmatpush1.xpose.msra.mxu0 0.0
  %582 = vmatprep.subr.mxu0 0.0
  %583 = vmatpush1.xpose.msra.mxu0 0.0
  %584 = vmatprep.mubr.f32.mxu0 0.0
  %585 = vmatmul.mubr.f32.gmra.mrb[0].mxu0 %v467
  %v586 = vpop.f32.mrb[0].mxu0
  %v587 = vadd.f32 0.0, %v586
  %v588 = vpop.f32.mrb[0].mxu0
  %589 = vmatprep.mubr.f32.mxu0 0.0
  %590 = vmatmul.mubr.f32.gmra.mrb[0].mxu0 %v470
  %v591 = vpop.f32.mrb[0].mxu0
  %v592 = vadd.f32 0.0, %v591
  %v593 = vpop.f32.mrb[0].mxu0
  %594 = vdwg.mxu0
  %595 = vrot.lane.b32.xlu0 %v37, 72
  %v596 = vpop.permute.xlu0 %595
  %v597 = vsel %vm270, %v596, 0
  %599 = vmatprep.subr.mxu0 0.0
  %600 = vmatpush1.xpose.msra.mxu0 %v473
  %601 = vmatprep.subr.mxu0 0.0
  %602 = vmatpush1.xpose.msra.mxu0 %v476
  %603 = vmatprep.subr.mxu0 0.0
  %604 = vmatpush1.xpose.msra.mxu0 %v479
  %605 = vmatprep.subr.mxu0 0.0
  %606 = vmatpush1.xpose.msra.mxu0 %v482
  %607 = vmatprep.subr.mxu0 0.0
  %608 = vmatpush1.xpose.msra.mxu0 %v485
  %609 = vmatprep.subr.mxu0 0.0
  %610 = vmatpush1.xpose.msra.mxu0 %v488
  %611 = vmatprep.subr.mxu0 0.0
  %612 = vmatpush1.xpose.msra.mxu0 %v491
  %613 = vmatprep.subr.mxu0 0.0
  %614 = vmatpush1.xpose.msra.mxu0 %v494
  %615 = vmatprep.subr.mxu0 0.0
  %616 = vmatpush1.xpose.msra.mxu0 %v497
  %617 = vmatprep.subr.mxu0 0.0
  %618 = vmatpush1.xpose.msra.mxu0 %v500
  %619 = vmatprep.subr.mxu0 0.0
  %620 = vmatpush1.xpose.msra.mxu0 %v503
  %621 = vmatprep.subr.mxu0 0.0
  %622 = vmatpush1.xpose.msra.mxu0 %v506
  %623 = vmatprep.subr.mxu0 0.0
  %624 = vmatpush1.xpose.msra.mxu0 %v509
  %625 = vmatprep.subr.mxu0 0.0
  %626 = vmatpush1.xpose.msra.mxu0 %v512
  %627 = vmatprep.subr.mxu0 0.0
  %628 = vmatpush1.xpose.msra.mxu0 %v515
  %629 = vmatprep.subr.mxu0 0.0
  %630 = vmatpush1.xpose.msra.mxu0 %v518
  %631 = vmatprep.subr.mxu0 0.0
  %632 = vmatpush1.xpose.msra.mxu0 0.0
  %633 = vmatprep.subr.mxu0 0.0
  %634 = vmatpush1.xpose.msra.mxu0 0.0
  %635 = vmatprep.subr.mxu0 0.0
  %636 = vmatpush1.xpose.msra.mxu0 0.0
  %637 = vmatprep.subr.mxu0 0.0
  %638 = vmatpush1.xpose.msra.mxu0 0.0
  %639 = vmatprep.subr.mxu0 0.0
  %640 = vmatpush1.xpose.msra.mxu0 0.0
  %641 = vmatprep.subr.mxu0 0.0
  %642 = vmatpush1.xpose.msra.mxu0 0.0
  %643 = vmatprep.subr.mxu0 0.0
  %644 = vmatpush1.xpose.msra.mxu0 0.0
  %645 = vmatprep.subr.mxu0 0.0
  %646 = vmatpush1.xpose.msra.mxu0 0.0
  %647 = vmatprep.subr.mxu0 0.0
  %648 = vmatpush1.xpose.msra.mxu0 0.0
  %649 = vmatprep.subr.mxu0 0.0
  %650 = vmatpush1.xpose.msra.mxu0 0.0
  %651 = vmatprep.subr.mxu0 0.0
  %652 = vmatpush1.xpose.msra.mxu0 0.0
  %653 = vmatprep.subr.mxu0 0.0
  %654 = vmatpush1.xpose.msra.mxu0 0.0
  %655 = vmatprep.subr.mxu0 0.0
  %656 = vmatpush1.xpose.msra.mxu0 0.0
  %657 = vmatprep.subr.mxu0 0.0
  %658 = vmatpush1.xpose.msra.mxu0 0.0
  %659 = vmatprep.subr.mxu0 0.0
  %660 = vmatpush1.xpose.msra.mxu0 0.0
  %661 = vmatprep.subr.mxu0 0.0
  %662 = vmatpush1.xpose.msra.mxu0 0.0
  %663 = vmatprep.mubr.f32.mxu0 0.0
  %664 = vmatmul.mubr.f32.gmra.mrb[0].mxu0 %v597
  %v665 = vpop.f32.mrb[0].mxu0
  %v666 = vadd.f32 0.0, %v665
  %v667 = vpop.f32.mrb[0].mxu0
  %668 = vdwg.mxu0
  %v669 = vlaneseq
  %v670 = vshrl.u32 %v669, 7
  %v671 = vsub.s32 0, %v670
  %v672 = vrot.slane %v666, %v671
  %v674 = vsel %vm39, %v246, 0
  %v677 = vsel %vm39, %v247, 0
  %v680 = vsel %vm39, %v248, 0
  %v683 = vsel %vm39, %v249, 0
  %685 = vmatprep.subr.mxu0 0.0
  %686 = vmatpush1.msra.mxu0 %v587
  %687 = vmatprep.subr.mxu0 0.0
  %688 = vmatpush1.msra.mxu0 %v592
  %689 = vmatprep.subr.mxu0 0.0
  %690 = vmatpush1.msra.mxu0 0.0
  %691 = vmatprep.subr.mxu0 0.0
  %692 = vmatpush1.msra.mxu0 0.0
  %693 = vmatprep.subr.mxu0 0.0
  %694 = vmatpush1.msra.mxu0 0.0
  %695 = vmatprep.subr.mxu0 0.0
  %696 = vmatpush1.msra.mxu0 0.0
  %697 = vmatprep.subr.mxu0 0.0
  %698 = vmatpush1.msra.mxu0 0.0
  %699 = vmatprep.subr.mxu0 0.0
  %700 = vmatpush1.msra.mxu0 0.0
  %701 = vmatprep.subr.mxu0 0.0
  %702 = vmatpush1.msra.mxu0 0.0
  %703 = vmatprep.subr.mxu0 0.0
  %704 = vmatpush1.msra.mxu0 0.0
  %705 = vmatprep.subr.mxu0 0.0
  %706 = vmatpush1.msra.mxu0 0.0
  %707 = vmatprep.subr.mxu0 0.0
  %708 = vmatpush1.msra.mxu0 0.0
  %709 = vmatprep.subr.mxu0 0.0
  %710 = vmatpush1.msra.mxu0 0.0
  %711 = vmatprep.subr.mxu0 0.0
  %712 = vmatpush1.msra.mxu0 0.0
  %713 = vmatprep.subr.mxu0 0.0
  %714 = vmatpush1.msra.mxu0 0.0
  %715 = vmatprep.subr.mxu0 0.0
  %716 = vmatpush1.msra.mxu0 0.0
  %717 = vmatprep.subr.mxu0 0.0
  %718 = vmatpush1.msra.mxu0 0.0
  %719 = vmatprep.subr.mxu0 0.0
  %720 = vmatpush1.msra.mxu0 0.0
  %721 = vmatprep.subr.mxu0 0.0
  %722 = vmatpush1.msra.mxu0 0.0
  %723 = vmatprep.subr.mxu0 0.0
  %724 = vmatpush1.msra.mxu0 0.0
  %725 = vmatprep.subr.mxu0 0.0
  %726 = vmatpush1.msra.mxu0 0.0
  %727 = vmatprep.subr.mxu0 0.0
  %728 = vmatpush1.msra.mxu0 0.0
  %729 = vmatprep.subr.mxu0 0.0
  %730 = vmatpush1.msra.mxu0 0.0
  %731 = vmatprep.subr.mxu0 0.0
  %732 = vmatpush1.msra.mxu0 0.0
  %733 = vmatprep.subr.mxu0 0.0
  %734 = vmatpush1.msra.mxu0 0.0
  %735 = vmatprep.subr.mxu0 0.0
  %736 = vmatpush1.msra.mxu0 0.0
  %737 = vmatprep.subr.mxu0 0.0
  %738 = vmatpush1.msra.mxu0 0.0
  %739 = vmatprep.subr.mxu0 0.0
  %740 = vmatpush1.msra.mxu0 0.0
  %741 = vmatprep.subr.mxu0 0.0
  %742 = vmatpush1.msra.mxu0 0.0
  %743 = vmatprep.subr.mxu0 0.0
  %744 = vmatpush1.msra.mxu0 0.0
  %745 = vmatprep.subr.mxu0 0.0
  %746 = vmatpush1.msra.mxu0 0.0
  %747 = vmatprep.subr.mxu0 0.0
  %748 = vmatpush1.msra.mxu0 0.0
  %749 = vmatprep.mubr.f32.mxu0 0.0
  %750 = vmatmul.mubr.f32.gmra.mrb[0].mxu0 %v674
  %v751 = vpop.f32.mrb[0].mxu0
  %v752 = vadd.f32 %v672, %v751
  %v753 = vpop.f32.mrb[0].mxu0
  %754 = vmatprep.mubr.f32.mxu0 0.0
  %755 = vmatmul.mubr.f32.gmra.mrb[0].mxu0 %v677
  %v756 = vpop.f32.mrb[0].mxu0
  %v757 = vadd.f32 %v672, %v756
  %v758 = vpop.f32.mrb[0].mxu0
  %759 = vmatprep.mubr.f32.mxu0 0.0
  %760 = vmatmul.mubr.f32.gmra.mrb[0].mxu0 %v680
  %v761 = vpop.f32.mrb[0].mxu0
  %v762 = vadd.f32 %v672, %v761
  %v763 = vpop.f32.mrb[0].mxu0
  %764 = vmatprep.mubr.f32.mxu0 0.0
  %765 = vmatmul.mubr.f32.gmra.mrb[0].mxu0 %v683
  %v766 = vpop.f32.mrb[0].mxu0
  %v767 = vadd.f32 %v672, %v766
  %v768 = vpop.f32.mrb[0].mxu0
  %769 = vdwg.mxu0
  %770 = vst [vmem:[%s7] sm:$0xff] %v752
  %771 = vst [vmem:[%s7 + $0x8] sm:$0xff] %v757
  %772 = vst [vmem:[%s7 + $0x10] sm:$0xff] %v762
  %773 = vst [vmem:[%s7 + $0x18] sm:$0xff] %v767
  // Predicated region
  $region30: #{_lambda_.1} parent=0 // pred_check
    _
  $region31: #{_lambda_.1} parent=0 // pred_check_branch
    %775 = sbr.rel (0) target = $region33
  $region32: #{_lambda_.1} parent=0 // pred_region
    _
  $region33: #{_lambda_.1} parent=0 // pred_fallthru
    _
  // Predicated region
  $region34: #{_lambda_.1} parent=0 // pred_check
    _
  $region35: #{_lambda_.1} parent=0 // pred_check_branch
    %777 = sbr.rel (0) target = $region37
  $region36: #{_lambda_.1} parent=0 // pred_region
    _
  $region37: #{_lambda_.1} parent=0 // pred_fallthru
    _

</llo_original>
